<compile_context>
chip_gen: v7x
topology: tpu7x:2x2x1
jax: 0.10.0
libtpu: 0.0.40
codegen_flags: <defaults>
</compile_context>

<pallas_src>
import functools

import numpy as np
import jax
import jax.numpy as jnp
from jax import lax
from jax.experimental import pallas as pl
from jax.experimental.pallas import tpu as pltpu


def _round_up(x, m):
    return (x + m - 1) // m * m


def _roll_lanes(x, shift):
    """Lane-axis rotate, jnp.roll semantics: out[..., p] = x[..., (p - shift) % L]."""
    size = x.shape[-1]
    shift = shift % size
    if shift == 0:
        return x
    if size % 128 == 0:
        return pltpu.roll(x, shift, x.ndim - 1)        # XLU lane rotation
    # TODO(synk): non-128-multiple H*W falls back to slice+concat (extra copy).
    return jnp.concatenate([x[..., size - shift:], x[..., :size - shift]], axis=-1)


def _conv_block_kernel(x_ref, w_ref, p_ref, m_ref, o_ref, patches_ref, *,
                       Nb, H, W, Cin, Cout, norm_mode, eps):
    """One grid step = Nb images, channels-major.

    x_ref:       (Nb, Cin, H*W)     input, H*W on the 128-lane axis
    w_ref:       (Coutp, 9*Cin)     3x3 taps flattened on K (compute dtype)
    p_ref:       (3, Coutp, 1) f32  [bias, scale, shift] per-channel columns
    m_ref:       (9, 1, H*W)        per-tap edge-validity masks (compute dtype)
    o_ref:       (Nb, Cout, H*W)    channels-major output
    patches_ref: (9*Cin, Nb*H*W)    im2col scratch (compute dtype)
    """
    HW = H * W
    cdt = patches_ref.dtype

    # ---- im2col: 9 lane-rotated, edge-masked taps per image, written once
    #      into the dense patches scratch (no halo scratch, no concat).
    for i in range(Nb):                                        # static, small Nb
        xi = x_ref[i].astype(cdt)                              # (Cin, HW)
        for t in range(9):
            dh, dw = t // 3, t % 3
            # tap[p] = x[p + (dh-1)*W + (dw-1)]  -> roll by the negated offset
            shift = ((1 - dh) * W + (1 - dw)) % HW
            tap = _roll_lanes(xi, shift)
            if (dh, dw) != (1, 1):                             # centre tap needs no mask
                tap = tap * m_ref[t]                           # zero out-of-image / wrapped lanes
            patches_ref[t * Cin:(t + 1) * Cin, i * HW:(i + 1) * HW] = tap

    # ---- one MXU GEMM, f32 accumulation, result already channels-major.
    acc = jnp.dot(w_ref[...], patches_ref[...],
                  preferred_element_type=jnp.float32)          # (Coutp, Nb*HW)

    # ---- conv bias + ReLU (+ folded eval-mode batchnorm), lane-dense f32.
    acc = jnp.maximum(acc + p_ref[0], 0.0)
    if norm_mode == "affine":
        acc = acc * p_ref[1] + p_ref[2]

    # Dropout2d(p=0.1) in eval mode is the identity.
    for i in range(Nb):
        a = acc[:, i * HW:(i + 1) * HW]                        # (Coutp, HW)
        if norm_mode == "instance":                            # per-(n, c) stats
            mu = jnp.mean(a, axis=1, keepdims=True)
            var = jnp.mean(jnp.square(a - mu), axis=1, keepdims=True)
            a = (a - mu) * lax.rsqrt(var + eps)
        o_ref[i] = a[:Cout, :].astype(o_ref.dtype)             # lane-dense store


def _vmem_capacity_bytes():
    """Per-core VMEM (v5e/v6e: 128 MiB, v7x: 64 MiB); conservative fallback."""
    try:
        info = pltpu.get_tpu_info()
        cap = getattr(info, "vmem_capacity_bytes", None)
        if cap:
            return int(cap)
    except Exception:
        pass
    return 64 << 20


def _pick_batch_block(N, H, W, Cin, Cout, in_bytes, cdt_bytes, out_bytes,
                      budget_bytes, max_images=8):
    """Largest divisor of N whose per-step footprint fits the budget, capped so
    the grid keeps >= 2 steps (v7x megacore + pipelining) and the static
    per-image tap unroll stays small."""
    HW = H * W
    lanes = _round_up(HW, 128)
    cin8 = _round_up(Cin, 8)
    cout8 = _round_up(Cout, 8)
    k8 = _round_up(9 * Cin, 8)
    per_image = (
        2 * in_bytes * cin8 * lanes          # input block (double-buffered)
        + cdt_bytes * k8 * lanes             # im2col patches scratch
        + 2 * cdt_bytes * cin8 * lanes       # live rolled/masked tap temporaries
        + 4 * cout8 * lanes                  # f32 accumulator
        + 2 * out_bytes * cout8 * lanes)     # output block (double-buffered)
    fixed = 2 * (cdt_bytes * cout8 * _round_up(9 * Cin, 128)   # weights (x2 bufs)
                 + 4 * 3 * 8 * 128                             # params
                 + cdt_bytes * 9 * 8 * lanes)                  # masks
    avail = max(budget_bytes - fixed, per_image)
    max_nb = int(min(max(avail // per_image, 1), max_images))
    if N >= 2:
        max_nb = min(max_nb, max(N // 2, 1))   # keep >= 2 grid steps
    nb = 1
    for d in range(1, min(N, max_nb) + 1):
        if N % d == 0:
            nb = d
    return nb


def conv_block_one_stage(x_nchw, weight, bias, *, normalization='none',
                         bn_gamma=None, bn_beta=None, bn_mean=None, bn_var=None,
                         eps=1e-5, compute_dtype=None):
    """Forward pass of ConvBlockOneStage (inference).

    x_nchw: (N, Cin, H, W)   weight: (Cout, Cin, 3, 3)   bias: (Cout,)
    Returns (N, Cout, H, W).
    """
    N, Cin, H, W = x_nchw.shape
    Cout = weight.shape[0]
    HW = H * W
    Coutp = _round_up(Cout, 8)             # sublane-align the GEMM M dim
    if compute_dtype is None:
        compute_dtype = x_nchw.dtype       # bf16 MXU path is opt-in on v6e/v7x
    compute_dtype = np.dtype(compute_dtype)

    # Channels-major view: (N, Cin, H*W) is the same memory layout as NCHW.
    x_flat = x_nchw.reshape(N, Cin, HW)

    # 3x3 taps flattened on K (ordering (dh, dw, cin)), output channels on M.
    w_mat = jnp.transpose(weight, (0, 2, 3, 1)).reshape(Cout, 9 * Cin)
    w_mat = jnp.pad(w_mat, ((0, Coutp - Cout), (0, 0))).astype(compute_dtype)

    if normalization == 'none':
        norm_mode = 'none'
        scale = jnp.ones((Cout,), jnp.float32)
        shift = jnp.zeros((Cout,), jnp.float32)
    elif normalization == 'batchnorm':
        norm_mode = 'affine'   # eval-mode running stats folded to scale/shift
        inv_std = 1.0 / jnp.sqrt(bn_var.astype(jnp.float32) + eps)
        scale = bn_gamma.astype(jnp.float32) * inv_std
        shift = bn_beta.astype(jnp.float32) - bn_mean.astype(jnp.float32) * scale
    elif normalization == 'instancenorm':
        norm_mode = 'instance'  # affine=False, per-(n, c) stats in-kernel
        scale = jnp.ones((Cout,), jnp.float32)
        shift = jnp.zeros((Cout,), jnp.float32)
    else:
        # TODO(synk): groupnorm (num_groups=16) branch not implemented.
        raise NotImplementedError(normalization)

    params = jnp.zeros((3, Coutp, 1), jnp.float32)
    params = params.at[0, :Cout, 0].set(bias.astype(jnp.float32))
    params = params.at[1, :Cout, 0].set(scale)
    params = params.at[2, :Cout, 0].set(shift)

    # Edge-validity masks for the 9 taps: precomputed (no int div/mod in-kernel);
    # they also absorb the circular wrap of the in-kernel lane rotations.
    pix = jnp.arange(HW)
    hh, ww = pix // W, pix % W
    masks = []
    for dh in range(3):
        for dw in range(3):
            valid = ((hh + dh - 1 >= 0) & (hh + dh - 1 < H)
                     & (ww + dw - 1 >= 0) & (ww + dw - 1 < W))
            masks.append(valid)
    masks = jnp.stack(masks).reshape(9, 1, HW).astype(compute_dtype)

    cap = _vmem_capacity_bytes()
    Nb = _pick_batch_block(
        N, H, W, Cin, Cout,
        in_bytes=x_nchw.dtype.itemsize, cdt_bytes=compute_dtype.itemsize,
        out_bytes=x_nchw.dtype.itemsize, budget_bytes=cap // 2)
    grid = (N // Nb,)

    kernel = functools.partial(
        _conv_block_kernel, Nb=Nb, H=H, W=W, Cin=Cin, Cout=Cout,
        norm_mode=norm_mode, eps=float(eps))

    out = pl.pallas_call(
        kernel,
        out_shape=jax.ShapeDtypeStruct((N, Cout, HW), x_nchw.dtype),
        grid_spec=pltpu.PrefetchScalarGridSpec(
            num_scalar_prefetch=0,
            grid=grid,
            in_specs=[
                pl.BlockSpec((Nb, Cin, HW), lambda n: (n, 0, 0)),
                # TODO(synk): constant-index weight/params/mask operands could be
                # single-buffered via pipeline_mode=pl.Buffered(1); negligible here.
                pl.BlockSpec((Coutp, 9 * Cin), lambda n: (0, 0)),
                pl.BlockSpec((3, Coutp, 1), lambda n: (0, 0, 0)),
                pl.BlockSpec((9, 1, HW), lambda n: (0, 0, 0)),
            ],
            out_specs=pl.BlockSpec((Nb, Cout, HW), lambda n: (n, 0, 0)),
            scratch_shapes=[pltpu.VMEM((9 * Cin, Nb * HW), compute_dtype)],
        ),
        compiler_params=pltpu.CompilerParams(
            dimension_semantics=("parallel",),
            vmem_limit_bytes=int(cap * 0.85)),
    )(x_flat, w_mat, params, masks)

    # (N, Cout, H*W) -> (N, Cout, H, W): contiguous reshape, no transpose.
    return out.reshape(N, Cout, H, W)


def _reference(x_nchw, weight, bias):
    """Pure-JAX reference (Conv2d pad=1 + bias + ReLU), NCHW in/out."""
    out = lax.conv_general_dilated(
        x_nchw.astype(jnp.float32), weight.astype(jnp.float32),
        window_strides=(1, 1), padding=((1, 1), (1, 1)),
        dimension_numbers=('NCHW', 'OIHW', 'NCHW'))
    out = out + bias.reshape(1, -1, 1, 1)
    return jnp.maximum(out, 0.0)


if __name__ == "__main__":
    N, Cin, Cout, H, W = 2, 4, 8, 16, 16

    key = jax.random.PRNGKey(0)
    kx, kw, kb, kg, kbeta, km, kv = jax.random.split(key, 7)

    x = jax.random.normal(kx, (N, Cin, H, W), dtype=jnp.float32)
    fan_in = Cin * 3 * 3
    bound = 1.0 / (fan_in ** 0.5)
    weight = jax.random.uniform(kw, (Cout, Cin, 3, 3), jnp.float32, -bound, bound)
    bias = jax.random.uniform(kb, (Cout,), jnp.float32, -bound, bound)

    ref = _reference(x, weight, bias)

    # --- normalization='none' -------------------------------------------------
    out = conv_block_one_stage(x, weight, bias, normalization='none')
    out = jax.block_until_ready(out)
    assert out.shape == (N, Cout, H, W), out.shape
    err = float(jnp.max(jnp.abs(out - ref)))
    assert jnp.allclose(out, ref, atol=1e-4, rtol=1e-4), err

    # --- normalization='batchnorm' (eval mode, folded scale/shift) -------------
    gamma = jax.random.normal(kg, (Cout,), jnp.float32) * 0.1 + 1.0
    beta = jax.random.normal(kbeta, (Cout,), jnp.float32) * 0.1
    mean = jax.random.normal(km, (Cout,), jnp.float32) * 0.1
    var = jax.random.uniform(kv, (Cout,), jnp.float32, 0.5, 1.5)
    eps = 1e-5

    out_bn = conv_block_one_stage(x, weight, bias, normalization='batchnorm',
                                  bn_gamma=gamma, bn_beta=beta,
                                  bn_mean=mean, bn_var=var, eps=eps)
    out_bn = jax.block_until_ready(out_bn)
    ref_bn = ((ref - mean.reshape(1, -1, 1, 1))
              / jnp.sqrt(var.reshape(1, -1, 1, 1) + eps)
              * gamma.reshape(1, -1, 1, 1) + beta.reshape(1, -1, 1, 1))
    err = float(jnp.max(jnp.abs(out_bn - ref_bn)))
    assert jnp.allclose(out_bn, ref_bn, atol=1e-4, rtol=1e-4), err

    # --- normalization='instancenorm' (affine=False, per-(n,c) stats) ----------
    out_in = conv_block_one_stage(x, weight, bias, normalization='instancenorm',
                                  eps=eps)
    out_in = jax.block_until_ready(out_in)
    mu = jnp.mean(ref, axis=(2, 3), keepdims=True)
    va = jnp.mean(jnp.square(ref - mu), axis=(2, 3), keepdims=True)
    ref_in = (ref - mu) / jnp.sqrt(va + eps)
    err = float(jnp.max(jnp.abs(out_in - ref_in)))
    assert jnp.allclose(out_in, ref_in, atol=1e-3, rtol=1e-3), err

    print("KERNEL_OK")
</pallas_src>

<mosaic_0001>
module attributes {stable_mosaic.version = 11 : i64} {
  func.func @_conv_block_kernel(%arg0: i32, %arg1: memref<1x4x256xf32, #tpu.memory_space<vmem>>, %arg2: memref<8x36xf32, #tpu.memory_space<vmem>>, %arg3: memref<3x8x1xf32, #tpu.memory_space<vmem>>, %arg4: memref<9x1x256xf32, #tpu.memory_space<vmem>>, %arg5: memref<1x8x256xf32, #tpu.memory_space<vmem>>, %arg6: memref<36x256xf32, #tpu.memory_space<vmem>>) attributes {dimension_semantics = [#tpu.dimension_semantics<parallel>], iteration_bounds = array<i64: 2>, scalar_prefetch = 0 : i64, scratch_operands = 1 : i64, tpu.core_type = #tpu.core_type<tc>, window_params = [{transform_indices = @transform_0, window_bounds = array<i64: 1, 4, 256>}, {pipeline_mode = #tpu.pipeline_mode<synchronous>, transform_indices = @transform_1, window_bounds = array<i64: 8, 36>}, {pipeline_mode = #tpu.pipeline_mode<synchronous>, transform_indices = @transform_2, window_bounds = array<i64: 3, 8, 1>}, {pipeline_mode = #tpu.pipeline_mode<synchronous>, transform_indices = @transform_3, window_bounds = array<i64: 9, 1, 256>}, {transform_indices = @transform_4, window_bounds = array<i64: 1, 8, 256>}]} {
    %c0 = arith.constant 0 : index
    %c0_0 = arith.constant 0 : index
    %c0_1 = arith.constant 0 : index
    %0 = vector.load %arg1[%c0, %c0_0, %c0_1] : memref<1x4x256xf32, #tpu.memory_space<vmem>>, vector<1x4x256xf32>
    %1 = vector.shape_cast %0 : vector<1x4x256xf32> to vector<4x256xf32>
    %c17_i32 = arith.constant 17 : i32
    %2 = tpu.dynamic_rotate %1 by %c17_i32 dim 1 : vector<4x256xf32>, i32 -> vector<4x256xf32>
    %c0_2 = arith.constant 0 : index
    %c0_3 = arith.constant 0 : index
    %c0_4 = arith.constant 0 : index
    %3 = vector.load %arg4[%c0_2, %c0_3, %c0_4] : memref<9x1x256xf32, #tpu.memory_space<vmem>>, vector<1x1x256xf32>
    %4 = vector.shape_cast %3 : vector<1x1x256xf32> to vector<1x256xf32>
    %5 = vector.broadcast %4 : vector<1x256xf32> to vector<4x256xf32>
    %6 = arith.mulf %2, %5 : vector<4x256xf32>
    %c0_5 = arith.constant 0 : index
    %c0_6 = arith.constant 0 : index
    %7 = vector.load %arg6[%c0_5, %c0_6] : memref<36x256xf32, #tpu.memory_space<vmem>>, vector<4x256xf32>
    tpu.vector_store %arg6[%c0_5, %c0_6], %6 {strides = array<i32>} : memref<36x256xf32, #tpu.memory_space<vmem>>, vector<4x256xf32>,
    %c16_i32 = arith.constant 16 : i32
    %8 = tpu.dynamic_rotate %1 by %c16_i32 dim 1 : vector<4x256xf32>, i32 -> vector<4x256xf32>
    %c1 = arith.constant 1 : index
    %c0_7 = arith.constant 0 : index
    %c0_8 = arith.constant 0 : index
    %9 = vector.load %arg4[%c1, %c0_7, %c0_8] : memref<9x1x256xf32, #tpu.memory_space<vmem>>, vector<1x1x256xf32>
    %10 = vector.shape_cast %9 : vector<1x1x256xf32> to vector<1x256xf32>
    %11 = vector.broadcast %10 : vector<1x256xf32> to vector<4x256xf32>
    %12 = arith.mulf %8, %11 : vector<4x256xf32>
    %c4 = arith.constant 4 : index
    %c0_9 = arith.constant 0 : index
    %13 = vector.load %arg6[%c4, %c0_9] : memref<36x256xf32, #tpu.memory_space<vmem>>, vector<4x256xf32>
    tpu.vector_store %arg6[%c4, %c0_9], %12 {strides = array<i32>} : memref<36x256xf32, #tpu.memory_space<vmem>>, vector<4x256xf32>,
    %c15_i32 = arith.constant 15 : i32
    %14 = tpu.dynamic_rotate %1 by %c15_i32 dim 1 : vector<4x256xf32>, i32 -> vector<4x256xf32>
    %c2 = arith.constant 2 : index
    %c0_10 = arith.constant 0 : index
    %c0_11 = arith.constant 0 : index
    %15 = vector.load %arg4[%c2, %c0_10, %c0_11] : memref<9x1x256xf32, #tpu.memory_space<vmem>>, vector<1x1x256xf32>
    %16 = vector.shape_cast %15 : vector<1x1x256xf32> to vector<1x256xf32>
    %17 = vector.broadcast %16 : vector<1x256xf32> to vector<4x256xf32>
    %18 = arith.mulf %14, %17 : vector<4x256xf32>
    %c8 = arith.constant 8 : index
    %c0_12 = arith.constant 0 : index
    %19 = vector.load %arg6[%c8, %c0_12] : memref<36x256xf32, #tpu.memory_space<vmem>>, vector<4x256xf32>
    tpu.vector_store %arg6[%c8, %c0_12], %18 {strides = array<i32>} : memref<36x256xf32, #tpu.memory_space<vmem>>, vector<4x256xf32>,
    %c1_i32 = arith.constant 1 : i32
    %20 = tpu.dynamic_rotate %1 by %c1_i32 dim 1 : vector<4x256xf32>, i32 -> vector<4x256xf32>
    %c3 = arith.constant 3 : index
    %c0_13 = arith.constant 0 : index
    %c0_14 = arith.constant 0 : index
    %21 = vector.load %arg4[%c3, %c0_13, %c0_14] : memref<9x1x256xf32, #tpu.memory_space<vmem>>, vector<1x1x256xf32>
    %22 = vector.shape_cast %21 : vector<1x1x256xf32> to vector<1x256xf32>
    %23 = vector.broadcast %22 : vector<1x256xf32> to vector<4x256xf32>
    %24 = arith.mulf %20, %23 : vector<4x256xf32>
    %c12 = arith.constant 12 : index
    %c0_15 = arith.constant 0 : index
    %25 = vector.load %arg6[%c12, %c0_15] : memref<36x256xf32, #tpu.memory_space<vmem>>, vector<4x256xf32>
    tpu.vector_store %arg6[%c12, %c0_15], %24 {strides = array<i32>} : memref<36x256xf32, #tpu.memory_space<vmem>>, vector<4x256xf32>,
    %c16 = arith.constant 16 : index
    %c0_16 = arith.constant 0 : index
    %26 = vector.load %arg6[%c16, %c0_16] : memref<36x256xf32, #tpu.memory_space<vmem>>, vector<4x256xf32>
    tpu.vector_store %arg6[%c16, %c0_16], %1 {strides = array<i32>} : memref<36x256xf32, #tpu.memory_space<vmem>>, vector<4x256xf32>,
    %c255_i32 = arith.constant 255 : i32
    %27 = tpu.dynamic_rotate %1 by %c255_i32 dim 1 : vector<4x256xf32>, i32 -> vector<4x256xf32>
    %c5 = arith.constant 5 : index
    %c0_17 = arith.constant 0 : index
    %c0_18 = arith.constant 0 : index
    %28 = vector.load %arg4[%c5, %c0_17, %c0_18] : memref<9x1x256xf32, #tpu.memory_space<vmem>>, vector<1x1x256xf32>
    %29 = vector.shape_cast %28 : vector<1x1x256xf32> to vector<1x256xf32>
    %30 = vector.broadcast %29 : vector<1x256xf32> to vector<4x256xf32>
    %31 = arith.mulf %27, %30 : vector<4x256xf32>
    %c20 = arith.constant 20 : index
    %c0_19 = arith.constant 0 : index
    %32 = vector.load %arg6[%c20, %c0_19] : memref<36x256xf32, #tpu.memory_space<vmem>>, vector<4x256xf32>
    tpu.vector_store %arg6[%c20, %c0_19], %31 {strides = array<i32>} : memref<36x256xf32, #tpu.memory_space<vmem>>, vector<4x256xf32>,
    %c241_i32 = arith.constant 241 : i32
    %33 = tpu.dynamic_rotate %1 by %c241_i32 dim 1 : vector<4x256xf32>, i32 -> vector<4x256xf32>
    %c6 = arith.constant 6 : index
    %c0_20 = arith.constant 0 : index
    %c0_21 = arith.constant 0 : index
    %34 = vector.load %arg4[%c6, %c0_20, %c0_21] : memref<9x1x256xf32, #tpu.memory_space<vmem>>, vector<1x1x256xf32>
    %35 = vector.shape_cast %34 : vector<1x1x256xf32> to vector<1x256xf32>
    %36 = vector.broadcast %35 : vector<1x256xf32> to vector<4x256xf32>
    %37 = arith.mulf %33, %36 : vector<4x256xf32>
    %c24 = arith.constant 24 : index
    %c0_22 = arith.constant 0 : index
    %38 = vector.load %arg6[%c24, %c0_22] : memref<36x256xf32, #tpu.memory_space<vmem>>, vector<4x256xf32>
    tpu.vector_store %arg6[%c24, %c0_22], %37 {strides = array<i32>} : memref<36x256xf32, #tpu.memory_space<vmem>>, vector<4x256xf32>,
    %c240_i32 = arith.constant 240 : i32
    %39 = tpu.dynamic_rotate %1 by %c240_i32 dim 1 : vector<4x256xf32>, i32 -> vector<4x256xf32>
    %c7 = arith.constant 7 : index
    %c0_23 = arith.constant 0 : index
    %c0_24 = arith.constant 0 : index
    %40 = vector.load %arg4[%c7, %c0_23, %c0_24] : memref<9x1x256xf32, #tpu.memory_space<vmem>>, vector<1x1x256xf32>
    %41 = vector.shape_cast %40 : vector<1x1x256xf32> to vector<1x256xf32>
    %42 = vector.broadcast %41 : vector<1x256xf32> to vector<4x256xf32>
    %43 = arith.mulf %39, %42 : vector<4x256xf32>
    %c28 = arith.constant 28 : index
    %c0_25 = arith.constant 0 : index
    %44 = vector.load %arg6[%c28, %c0_25] : memref<36x256xf32, #tpu.memory_space<vmem>>, vector<4x256xf32>
    tpu.vector_store %arg6[%c28, %c0_25], %43 {strides = array<i32>} : memref<36x256xf32, #tpu.memory_space<vmem>>, vector<4x256xf32>,
    %c239_i32 = arith.constant 239 : i32
    %45 = tpu.dynamic_rotate %1 by %c239_i32 dim 1 : vector<4x256xf32>, i32 -> vector<4x256xf32>
    %c8_26 = arith.constant 8 : index
    %c0_27 = arith.constant 0 : index
    %c0_28 = arith.constant 0 : index
    %46 = vector.load %arg4[%c8_26, %c0_27, %c0_28] : memref<9x1x256xf32, #tpu.memory_space<vmem>>, vector<1x1x256xf32>
    %47 = vector.shape_cast %46 : vector<1x1x256xf32> to vector<1x256xf32>
    %48 = vector.broadcast %47 : vector<1x256xf32> to vector<4x256xf32>
    %49 = arith.mulf %45, %48 : vector<4x256xf32>
    %c32 = arith.constant 32 : index
    %c0_29 = arith.constant 0 : index
    %50 = vector.load %arg6[%c32, %c0_29] : memref<36x256xf32, #tpu.memory_space<vmem>>, vector<4x256xf32>
    tpu.vector_store %arg6[%c32, %c0_29], %49 {strides = array<i32>} : memref<36x256xf32, #tpu.memory_space<vmem>>, vector<4x256xf32>,
    %c0_30 = arith.constant 0 : index
    %c0_31 = arith.constant 0 : index
    %51 = vector.load %arg2[%c0_30, %c0_31] : memref<8x36xf32, #tpu.memory_space<vmem>>, vector<8x36xf32>
    %c0_32 = arith.constant 0 : index
    %c0_33 = arith.constant 0 : index
    %52 = vector.load %arg6[%c0_32, %c0_33] : memref<36x256xf32, #tpu.memory_space<vmem>>, vector<36x256xf32>
    %cst = arith.constant dense<0.000000e+00> : vector<8x256xf32>
    %53 = tpu.matmul %51, %52, %cst {dimension_numbers = #tpu.dot_dimension_numbers<[1], [0], [0], [1], [0, 0, 1, 1], [], []>} : vector<8x36xf32>, vector<36x256xf32>, vector<8x256xf32> -> vector<8x256xf32>
    %c0_34 = arith.constant 0 : index
    %c0_35 = arith.constant 0 : index
    %c0_36 = arith.constant 0 : index
    %54 = vector.load %arg3[%c0_34, %c0_35, %c0_36] : memref<3x8x1xf32, #tpu.memory_space<vmem>>, vector<1x8x1xf32>
    %55 = vector.shape_cast %54 : vector<1x8x1xf32> to vector<8x1xf32>
    %56 = vector.broadcast %55 : vector<8x1xf32> to vector<8x256xf32>
    %57 = arith.addf %53, %56 : vector<8x256xf32>
    %cst_37 = arith.constant 0.000000e+00 : f32
    %58 = vector.broadcast %cst_37 : f32 to vector<8x256xf32>
    %59 = arith.maximumf %57, %58 : vector<8x256xf32>
    %c0_38 = arith.constant 0 : index
    %c0_39 = arith.constant 0 : index
    %c0_40 = arith.constant 0 : index
    %60 = vector.load %arg5[%c0_38, %c0_39, %c0_40] : memref<1x8x256xf32, #tpu.memory_space<vmem>>, vector<1x8x256xf32>
    %61 = vector.shape_cast %60 : vector<1x8x256xf32> to vector<8x256xf32>
    %62 = vector.shape_cast %59 : vector<8x256xf32> to vector<1x8x256xf32>
    tpu.vector_store %arg5[%c0_38, %c0_39, %c0_40], %62 {strides = array<i32>} : memref<1x8x256xf32, #tpu.memory_space<vmem>>, vector<1x8x256xf32>,
    return
  }
  func.func @transform_0(%arg0: i32) -> (i32, i32, i32) {
    %c0_i32 = arith.constant 0 : i32
    %c0_i32_0 = arith.constant 0 : i32
    %c0_i32_1 = arith.constant 0 : i32
    return %arg0, %c0_i32, %c0_i32_0 : i32, i32, i32
  }
  func.func @transform_1(%arg0: i32) -> (i32, i32) {
    %c0_i32 = arith.constant 0 : i32
    %c0_i32_0 = arith.constant 0 : i32
    %c0_i32_1 = arith.constant 0 : i32
    return %c0_i32, %c0_i32_0 : i32, i32
  }
  func.func @transform_2(%arg0: i32) -> (i32, i32, i32) {
    %c0_i32 = arith.constant 0 : i32
    %c0_i32_0 = arith.constant 0 : i32
    %c0_i32_1 = arith.constant 0 : i32
    %c0_i32_2 = arith.constant 0 : i32
    return %c0_i32, %c0_i32_0, %c0_i32_1 : i32, i32, i32
  }
  func.func @transform_3(%arg0: i32) -> (i32, i32, i32) {
    %c0_i32 = arith.constant 0 : i32
    %c0_i32_0 = arith.constant 0 : i32
    %c0_i32_1 = arith.constant 0 : i32
    %c0_i32_2 = arith.constant 0 : i32
    return %c0_i32, %c0_i32_0, %c0_i32_1 : i32, i32, i32
  }
  func.func @transform_4(%arg0: i32) -> (i32, i32, i32) {
    %c0_i32 = arith.constant 0 : i32
    %c0_i32_0 = arith.constant 0 : i32
    %c0_i32_1 = arith.constant 0 : i32
    return %arg0, %c0_i32, %c0_i32_0 : i32, i32, i32
  }
}

</mosaic_0001>

<llo_original>
// kernel: tpu_custom_call.1
$region0: #{tpu_custom_call.1}
  #allocation0 [shape = 'u32[]', space=smem, size = 0x4, offset = 0x4, fixed_abs, tag = 'smem constant byte address 0x4 - core index']
  #allocation1 [shape = 'u32[144,128]{1,0:T(1,128)}', space=vmem, size = 0x12000, scoped, tag = 'internal scratch']
  #allocation2 [shape = 'f32[36,256]{1,0:T(8,128)}', space=vmem, size = 0xa000, scoped, tag = 'scratch operand']
  %s0 = inlined_call_operand.vmem [shape: f32[2,4,256], index: 0, kind: input, shape index: {}]
  %s1 = inlined_call_operand.hbm [shape: f32[8,36], index: 1, kind: input, shape index: {}]
  %s2 = inlined_call_operand.vmem [shape: f32[3,8,1], index: 2, kind: input, shape index: {}]
  %s3 = inlined_call_operand.vmem [shape: f32[9,1,256], index: 3, kind: input, shape index: {}]
  %s4 = inlined_call_operand.hbm [shape: f32[2,8,256], index: 4, kind: output, shape index: {}]
  %s5 = sld [smem:[#allocation0]]
  $region53: #{tpu_custom_call.1} parent=0
    _
  %s7 = ssub.s32 1, %s5
  %s8 = scalar_select 0, %s7, %s5
  $region1: #{tpu_custom_call.1} parent=0
    #allocation3 [shape = 'u8[4096]{0}', space=vmem, size = 0x1000, scoped, tag = 'input window, operand 1, single buffered']
    #allocation4 [shape = 's32[2]{0}', space=sflag, size = 0x8, scoped, tag = 'scoped memory for tpu_custom_call.1']
    #allocation5 [shape = 's32[2]{0}', space=sflag, size = 0x8, scoped, tag = 'scoped memory for tpu_custom_call.1']
    #allocation6 [shape = 'u8[16384]{0}', space=vmem, size = 0x4000, scoped, tag = 'output window, operand 0']
    %9 = vsyncpa [#allocation4], 0
    %10 = vsyncpa [#allocation5], 0
    %s11 = scalar_lea.sflag [#allocation5], 1
    %12 = vsyncpa %s11, 0
    loop: start=0, step=1, limit=4
    $region2: #{tpu_custom_call.1} parent=1 // loop_pre_header
      _
    $region3: #{tpu_custom_call.1} parent=1 // loop_header
      %s14 = sphi 0, %s18
      %p15 = scmp.ge.s32.totalorder %s14, 4
      %s24 = sphi 0, %s26
      %s27 = sphi 0, %s24
      %s28 = sphi 0, %s27
      %s44 = sphi 0, %s28
      %s48 = sphi 0, %s48
      %s50 = sphi 0, %s48
      %s51 = sphi 0, %s50
      %s65 = sphi 0, %s51
      %s69 = sphi 0, %s69
      %s71 = sphi 0, %s69
      %s72 = sphi 0, %s71
      %s86 = sphi 0, %s72
      %s90 = sphi 0, %s90
      %s92 = sphi 0, %s90
      %s93 = sphi 0, %s92
      %s107 = sphi 0, %s93
      %s113 = sphi 0, %s115
      %s116 = sphi 0, %s113
      %s117 = sphi 0, %s116
      %s133 = sphi 0, %s117
    $region4: #{tpu_custom_call.1} parent=1 // loop_header_branch
      %17 = sbr.rel (%p15) target = $region8
    $region5: #{tpu_custom_call.1} parent=1 // loop_body
      %s19 = ssub.s32 %s14, 1
      %s20 = ssub.s32 %s14, 2
      %s21 = sadd.s32 %s14, 1
      %s22 = ssub.s32 %s14, %s21
      %p23 = scmp.eq.s32.totalorder %s22, 0
      %s25 = sadd.s32 %s24, 1
      %s26 = scalar_select %p23, %s24, %s25
      %p29 = pneg %p23
      %p30 = scmp.eq.s32.totalorder %s14, 1
      %p31 = por %p29, %p30
      %p32 = scmp.ne.s32.totalorder %s24, %s27
      %p33 = scmp.eq.s32.totalorder %s14, 0
      %p34 = por %p32, %p33
      %p35 = scmp.ne.s32.totalorder %s24, %s27
      %p36 = scmp.eq.s32.totalorder %s19, 1
      %p37 = por %p35, %p36
      %p38 = scmp.ne.s32.totalorder %s27, %s28
      %p39 = scmp.eq.s32.totalorder %s19, 0
      %p40 = por %p38, %p39
      %p41 = scmp.ne.s32.totalorder %s27, %s28
      %p42 = scmp.eq.s32.totalorder %s20, 1
      %p43 = por %p41, %p42
      %p45 = scmp.ne.s32.totalorder %s28, %s44
      %p46 = scmp.eq.s32.totalorder %s20, 0
      %p47 = por %p45, %p46
      %s49 = sadd.s32 %s48, 1
      %p52 = scmp.eq.s32.totalorder %s14, 1
      %p53 = scmp.ne.s32.totalorder %s48, %s50
      %p54 = scmp.eq.s32.totalorder %s14, 0
      %p55 = por %p53, %p54
      %p56 = scmp.ne.s32.totalorder %s48, %s50
      %p57 = scmp.eq.s32.totalorder %s19, 1
      %p58 = por %p56, %p57
      %p59 = scmp.ne.s32.totalorder %s50, %s51
      %p60 = scmp.eq.s32.totalorder %s19, 0
      %p61 = por %p59, %p60
      %p62 = scmp.ne.s32.totalorder %s50, %s51
      %p63 = scmp.eq.s32.totalorder %s20, 1
      %p64 = por %p62, %p63
      %p66 = scmp.ne.s32.totalorder %s51, %s65
      %p67 = scmp.eq.s32.totalorder %s20, 0
      %p68 = por %p66, %p67
      %s70 = sadd.s32 %s69, 1
      %p73 = scmp.eq.s32.totalorder %s14, 1
      %p74 = scmp.ne.s32.totalorder %s69, %s71
      %p75 = scmp.eq.s32.totalorder %s14, 0
      %p76 = por %p74, %p75
      %p77 = scmp.ne.s32.totalorder %s69, %s71
      %p78 = scmp.eq.s32.totalorder %s19, 1
      %p79 = por %p77, %p78
      %p80 = scmp.ne.s32.totalorder %s71, %s72
      %p81 = scmp.eq.s32.totalorder %s19, 0
      %p82 = por %p80, %p81
      %p83 = scmp.ne.s32.totalorder %s71, %s72
      %p84 = scmp.eq.s32.totalorder %s20, 1
      %p85 = por %p83, %p84
      %p87 = scmp.ne.s32.totalorder %s72, %s86
      %p88 = scmp.eq.s32.totalorder %s20, 0
      %p89 = por %p87, %p88
      %s91 = sadd.s32 %s90, 1
      %p94 = scmp.eq.s32.totalorder %s14, 1
      %p95 = scmp.ne.s32.totalorder %s90, %s92
      %p96 = scmp.eq.s32.totalorder %s14, 0
      %p97 = por %p95, %p96
      %p98 = scmp.ne.s32.totalorder %s90, %s92
      %p99 = scmp.eq.s32.totalorder %s19, 1
      %p100 = por %p98, %p99
      %p101 = scmp.ne.s32.totalorder %s92, %s93
      %p102 = scmp.eq.s32.totalorder %s19, 0
      %p103 = por %p101, %p102
      %p104 = scmp.ne.s32.totalorder %s92, %s93
      %p105 = scmp.eq.s32.totalorder %s20, 1
      %p106 = por %p104, %p105
      %p108 = scmp.ne.s32.totalorder %s93, %s107
      %p109 = scmp.eq.s32.totalorder %s20, 0
      %p110 = por %p108, %p109
      %s111 = ssub.s32 %s14, %s21
      %p112 = scmp.eq.s32.totalorder %s111, 0
      %s114 = sadd.s32 %s113, 1
      %s115 = scalar_select %p112, %s113, %s114
      %p118 = pneg %p112
      %p119 = scmp.eq.s32.totalorder %s14, 1
      %p120 = por %p118, %p119
      %p121 = scmp.ne.s32.totalorder %s113, %s116
      %p122 = scmp.eq.s32.totalorder %s14, 0
      %p123 = por %p121, %p122
      %p124 = scmp.ne.s32.totalorder %s113, %s116
      %p125 = scmp.eq.s32.totalorder %s19, 1
      %p126 = por %p124, %p125
      %p127 = scmp.ne.s32.totalorder %s116, %s117
      %p128 = scmp.eq.s32.totalorder %s19, 0
      %p129 = por %p127, %p128
      %p130 = scmp.ne.s32.totalorder %s116, %s117
      %p131 = scmp.eq.s32.totalorder %s20, 1
      %p132 = por %p130, %p131
      %p134 = scmp.ne.s32.totalorder %s117, %s133
      %p135 = scmp.eq.s32.totalorder %s20, 0
      %p136 = por %p134, %p135
      %p137 = scmp.le.s32.totalorder 1, %s14
      %p138 = scmp.lt.s32.totalorder %s14, 3
      %p139 = pnand %p137, %p138
      %p140 = pneg %p139
      // Predicated region
      $region9: #{tpu_custom_call.1} parent=5 // pred_check
        _
      $region10: #{tpu_custom_call.1} parent=5 // pred_check_branch
        %142 = sbr.rel (%p139) target = $region12
      $region11: #{tpu_custom_call.1} parent=5 // pred_region
        %s143 = ssub.s32 %s14, 1
        // Predicated region
        $region13: #{tpu_custom_call.1} parent=11 // pred_check
          %p144 = pneg %p61
        $region14: #{tpu_custom_call.1} parent=11 // pred_check_branch
          %146 = sbr.rel (%p144) target = $region16
        $region15: #{tpu_custom_call.1} parent=11 // pred_region
          %s148 = ssub.s32 128, 128
          %149 = vsyncadd [#allocation4], %s148
          %s151 = sshll.u32 [#allocation3], 4
          %s152 = int_to_ptr.vmem [resolvable:$true] %s151
          %154 = dma.hbm_to_vmem [thread:$0]  %s1, 128, %s152, [#allocation4]
        $region16: #{tpu_custom_call.1} parent=11 // pred_fallthru
          _
        // Predicated region
        $region17: #{tpu_custom_call.1} parent=11 // pred_check
          %p155 = pneg %p82
        $region18: #{tpu_custom_call.1} parent=11 // pred_check_branch
          %157 = sbr.rel (%p155) target = $region20
        $region19: #{tpu_custom_call.1} parent=11 // pred_region
          _
        $region20: #{tpu_custom_call.1} parent=11 // pred_fallthru
          _
        // Predicated region
        $region21: #{tpu_custom_call.1} parent=11 // pred_check
          %p158 = pneg %p103
        $region22: #{tpu_custom_call.1} parent=11 // pred_check_branch
          %160 = sbr.rel (%p158) target = $region24
        $region23: #{tpu_custom_call.1} parent=11 // pred_region
          _
        $region24: #{tpu_custom_call.1} parent=11 // pred_fallthru
          _
      $region12: #{tpu_custom_call.1} parent=5 // pred_fallthru
        _
      %p161 = scmp.lt.s32.totalorder %s14, 2
      // Predicated region
      $region25: #{tpu_custom_call.1} parent=5 // pred_check
        %p162 = pneg %p161
      $region26: #{tpu_custom_call.1} parent=5 // pred_check_branch
        %164 = sbr.rel (%p162) target = $region28
      $region27: #{tpu_custom_call.1} parent=5 // pred_region
        // Predicated region
        $region29: #{tpu_custom_call.1} parent=27 // pred_check
          %p165 = pneg %p34
        $region30: #{tpu_custom_call.1} parent=27 // pred_check_branch
          %167 = sbr.rel (%p165) target = $region32
        $region31: #{tpu_custom_call.1} parent=27 // pred_region
          %p168 = scmp.lt.s32.totalorder %s14, 1
          %s169 = scalar_select %p168, %s14, 1
          %s170 = smul.addr %s169, 2
          %s171 = smul.addr %s170, 4
          %s172 = scalar_lea.vmem %s0, %s171
        $region32: #{tpu_custom_call.1} parent=27 // pred_fallthru
          _
      $region28: #{tpu_custom_call.1} parent=5 // pred_fallthru
        _
      %p173 = scmp.le.s32.totalorder 1, %s14
      %p174 = scmp.lt.s32.totalorder %s14, 3
      %p175 = pnand %p173, %p174
      %p176 = pneg %p175
      // Predicated region
      $region33: #{tpu_custom_call.1} parent=5 // pred_check
        _
      $region34: #{tpu_custom_call.1} parent=5 // pred_check_branch
        %178 = sbr.rel (%p175) target = $region36
      $region35: #{tpu_custom_call.1} parent=5 // pred_region
        %s179 = ssub.s32 %s14, 1
        // Predicated region
        $region37: #{tpu_custom_call.1} parent=35 // pred_check
          %p180 = pneg %p61
        $region38: #{tpu_custom_call.1} parent=35 // pred_check_branch
          %182 = sbr.rel (%p180) target = $region40
        $region39: #{tpu_custom_call.1} parent=35 // pred_region
          %183 = dma.done [#allocation4], 128
        $region40: #{tpu_custom_call.1} parent=35 // pred_fallthru
          _
        %p184 = scmp.lt.s32.totalorder %s19, 1
        %s185 = scalar_select %p184, %s19, 1
        %s186 = smul.addr %s185, 2
        %s187 = smul.addr %s186, 4
        %s188 = scalar_lea.vmem %s0, %s187
        %p189 = pneg %p40
        %p190 = pneg %p37
        %p191 = pneg %p61
        %p192 = pneg %p58
        %p193 = pneg %p82
        %p194 = pneg %p79
        %p195 = pneg %p103
        %p196 = pneg %p100
        %p197 = pneg %p129
        %p198 = pneg %p126
        %s199 = sand.u32 %s116, 1
        %s200 = scalar_lea.sflag [#allocation5], %s199
        %s201 = sand.u32 %s116, 1
        %s202 = smul.addr %s201, 16
        %s203 = scalar_lea.vmem [#allocation6], %s202
        %p204 = scmp.lt.s32.totalorder %s19, 1
        %s205 = scalar_select %p204, %s19, 1
        %s206 = smul.addr %s205, 2
        %s207 = smul.addr %s206, 4
        %s208 = scalar_lea.vmem %s0, %s207
        %v209 = vld [vmem:[%s208] sm:$0xff]
        %v211 = vcombine.high %v209, %v209
        %213 = vrot.lane.b32.xlu0 %v209, 17
        %v214 = vpop.permute.xlu0 %213
        %215 = vrot.lane.b32.xlu0 %v211, 17
        %v216 = vpop.permute.xlu0 %215
        %v217 = vlaneseq
        %v218 = vand.u32 %v217, 127
        %vm219 = vcmp.lt.s32.totalorder %v218, 17
        %v220 = vsel %vm219, %v214, %v216
        %v221 = vsel %vm219, %v216, %v214
        %v222 = vld [vmem:[%s3] sm:$0x3]
        %v224 = vlaneseq
        %v225 = vshrl.u32 %v224, 7
        %v226 = vsub.s32 0, %v225
        %v227 = vrot.slane %v222, %v226
        %v228 = vlaneseq
        %v229 = vshrl.u32 %v228, 7
        %v230 = vsub.s32 1, %v229
        %v231 = vrot.slane %v222, %v230
        %v234 = vmul.f32 %v221, %v227
        %v235 = vmul.f32 %v220, %v231
        %236 = vst [vmem:[#allocation2] sm:$0xf] %v234
        %237 = vst [vmem:[#allocation2 + $0x8] sm:$0xf] %v235
        %238 = vrot.lane.b32.xlu0 %v209, 16
        %v239 = vpop.permute.xlu0 %238
        %240 = vrot.lane.b32.xlu0 %v211, 16
        %v241 = vpop.permute.xlu0 %240
        %vm242 = vcmp.lt.s32.totalorder %v218, 16
        %v243 = vsel %vm242, %v239, %v241
        %v244 = vsel %vm242, %v241, %v239
        %s245 = scalar_lea.vmem %s3, 2
        %v246 = vld [vmem:[%s245] sm:$0x3]
        %v248 = vlaneseq
        %v249 = vshrl.u32 %v248, 7
        %v250 = vsub.s32 0, %v249
        %v251 = vrot.slane %v246, %v250
        %v252 = vlaneseq
        %v253 = vshrl.u32 %v252, 7
        %v254 = vsub.s32 1, %v253
        %v255 = vrot.slane %v246, %v254
        %v258 = vmul.f32 %v244, %v251
        %v259 = vmul.f32 %v243, %v255
        %v262 = vrot.slane %v258, 4
        %v263 = vrot.slane %v259, 4
        %266 = vst [vmem:[#allocation2] sm:$0xf0] %v262
        %267 = vst [vmem:[#allocation2 + $0x8] sm:$0xf0] %v263
        %268 = vrot.lane.b32.xlu0 %v209, 15
        %v269 = vpop.permute.xlu0 %268
        %270 = vrot.lane.b32.xlu0 %v211, 15
        %v271 = vpop.permute.xlu0 %270
        %vm272 = vcmp.lt.s32.totalorder %v218, 15
        %v273 = vsel %vm272, %v269, %v271
        %v274 = vsel %vm272, %v271, %v269
        %s275 = scalar_lea.vmem %s3, 4
        %v276 = vld [vmem:[%s275] sm:$0x3]
        %v278 = vlaneseq
        %v279 = vshrl.u32 %v278, 7
        %v280 = vsub.s32 0, %v279
        %v281 = vrot.slane %v276, %v280
        %v282 = vlaneseq
        %v283 = vshrl.u32 %v282, 7
        %v284 = vsub.s32 1, %v283
        %v285 = vrot.slane %v276, %v284
        %v288 = vmul.f32 %v274, %v281
        %v289 = vmul.f32 %v273, %v285
        %290 = vst [vmem:[#allocation2 + $0x10] sm:$0xf] %v288
        %291 = vst [vmem:[#allocation2 + $0x18] sm:$0xf] %v289
        %292 = vrot.lane.b32.xlu0 %v209, 1
        %v293 = vpop.permute.xlu0 %292
        %294 = vrot.lane.b32.xlu0 %v211, 1
        %v295 = vpop.permute.xlu0 %294
        %vm296 = vcmp.lt.s32.totalorder %v218, 1
        %v297 = vsel %vm296, %v293, %v295
        %v298 = vsel %vm296, %v295, %v293
        %s299 = scalar_lea.vmem %s3, 6
        %v300 = vld [vmem:[%s299] sm:$0x3]
        %v302 = vlaneseq
        %v303 = vshrl.u32 %v302, 7
        %v304 = vsub.s32 0, %v303
        %v305 = vrot.slane %v300, %v304
        %v306 = vlaneseq
        %v307 = vshrl.u32 %v306, 7
        %v308 = vsub.s32 1, %v307
        %v309 = vrot.slane %v300, %v308
        %v312 = vmul.f32 %v298, %v305
        %v313 = vmul.f32 %v297, %v309
        %v316 = vrot.slane %v312, 4
        %v317 = vrot.slane %v313, 4
        %320 = vst [vmem:[#allocation2 + $0x10] sm:$0xf0] %v316
        %321 = vst [vmem:[#allocation2 + $0x18] sm:$0xf0] %v317
        %322 = vst [vmem:[#allocation2 + $0x20] sm:$0xf] %v209
        %323 = vst [vmem:[#allocation2 + $0x28] sm:$0xf] %v211
        %324 = vrot.lane.b32.xlu0 %v209, 127
        %v325 = vpop.permute.xlu0 %324
        %326 = vrot.lane.b32.xlu0 %v211, 127
        %v327 = vpop.permute.xlu0 %326
        %vm328 = vcmp.lt.s32.totalorder %v218, 127
        %v329 = vsel %vm328, %v325, %v327
        %v330 = vsel %vm328, %v327, %v325
        %s331 = scalar_lea.vmem %s3, 10
        %v332 = vld [vmem:[%s331] sm:$0x3]
        %v334 = vlaneseq
        %v335 = vshrl.u32 %v334, 7
        %v336 = vsub.s32 0, %v335
        %v337 = vrot.slane %v332, %v336
        %v338 = vlaneseq
        %v339 = vshrl.u32 %v338, 7
        %v340 = vsub.s32 1, %v339
        %v341 = vrot.slane %v332, %v340
        %v344 = vmul.f32 %v329, %v337
        %v345 = vmul.f32 %v330, %v341
        %v348 = vrot.slane %v344, 4
        %v349 = vrot.slane %v345, 4
        %352 = vst [vmem:[#allocation2 + $0x20] sm:$0xf0] %v348
        %353 = vst [vmem:[#allocation2 + $0x28] sm:$0xf0] %v349
        %354 = vrot.lane.b32.xlu0 %v209, 113
        %v355 = vpop.permute.xlu0 %354
        %356 = vrot.lane.b32.xlu0 %v211, 113
        %v357 = vpop.permute.xlu0 %356
        %vm358 = vcmp.lt.s32.totalorder %v218, 113
        %v359 = vsel %vm358, %v355, %v357
        %v360 = vsel %vm358, %v357, %v355
        %s361 = scalar_lea.vmem %s3, 12
        %v362 = vld [vmem:[%s361] sm:$0x3]
        %v364 = vlaneseq
        %v365 = vshrl.u32 %v364, 7
        %v366 = vsub.s32 0, %v365
        %v367 = vrot.slane %v362, %v366
        %v368 = vlaneseq
        %v369 = vshrl.u32 %v368, 7
        %v370 = vsub.s32 1, %v369
        %v371 = vrot.slane %v362, %v370
        %v374 = vmul.f32 %v359, %v367
        %v375 = vmul.f32 %v360, %v371
        %376 = vst [vmem:[#allocation2 + $0x30] sm:$0xf] %v374
        %377 = vst [vmem:[#allocation2 + $0x38] sm:$0xf] %v375
        %378 = vrot.lane.b32.xlu0 %v209, 112
        %v379 = vpop.permute.xlu0 %378
        %380 = vrot.lane.b32.xlu0 %v211, 112
        %v381 = vpop.permute.xlu0 %380
        %vm382 = vcmp.lt.s32.totalorder %v218, 112
        %v383 = vsel %vm382, %v379, %v381
        %v384 = vsel %vm382, %v381, %v379
        %s385 = scalar_lea.vmem %s3, 14
        %v386 = vld [vmem:[%s385] sm:$0x3]
        %v388 = vlaneseq
        %v389 = vshrl.u32 %v388, 7
        %v390 = vsub.s32 0, %v389
        %v391 = vrot.slane %v386, %v390
        %v392 = vlaneseq
        %v393 = vshrl.u32 %v392, 7
        %v394 = vsub.s32 1, %v393
        %v395 = vrot.slane %v386, %v394
        %v398 = vmul.f32 %v383, %v391
        %v399 = vmul.f32 %v384, %v395
        %v402 = vrot.slane %v398, 4
        %v403 = vrot.slane %v399, 4
        %406 = vst [vmem:[#allocation2 + $0x30] sm:$0xf0] %v402
        %407 = vst [vmem:[#allocation2 + $0x38] sm:$0xf0] %v403
        %408 = vrot.lane.b32.xlu0 %v209, 111
        %v409 = vpop.permute.xlu0 %408
        %410 = vrot.lane.b32.xlu0 %v211, 111
        %v411 = vpop.permute.xlu0 %410
        %vm412 = vcmp.lt.s32.totalorder %v218, 111
        %v413 = vsel %vm412, %v409, %v411
        %v414 = vsel %vm412, %v411, %v409
        %s415 = scalar_lea.vmem %s3, 16
        %v416 = vld [vmem:[%s415] sm:$0x3]
        %v418 = vlaneseq
        %v419 = vshrl.u32 %v418, 7
        %v420 = vsub.s32 0, %v419
        %v421 = vrot.slane %v416, %v420
        %v422 = vlaneseq
        %v423 = vshrl.u32 %v422, 7
        %v424 = vsub.s32 1, %v423
        %v425 = vrot.slane %v416, %v424
        %v428 = vmul.f32 %v413, %v421
        %v429 = vmul.f32 %v414, %v425
        %430 = vst [vmem:[#allocation2 + $0x40] sm:$0xf] %v428
        %431 = vst [vmem:[#allocation2 + $0x48] sm:$0xf] %v429
        %v432 = vld [vmem:[#allocation3] sm:$0xff]
        %v433 = vld [vmem:[#allocation2] sm:$0xff]
        %v434 = vld [vmem:[#allocation2 + $0x8] sm:$0xff]
        %v435 = vld [vmem:[#allocation2 + $0x10] sm:$0xff]
        %v436 = vld [vmem:[#allocation2 + $0x18] sm:$0xff]
        %v437 = vld [vmem:[#allocation2 + $0x20] sm:$0xff]
        %v438 = vld [vmem:[#allocation2 + $0x28] sm:$0xff]
        %v439 = vld [vmem:[#allocation2 + $0x30] sm:$0xff]
        %v440 = vld [vmem:[#allocation2 + $0x38] sm:$0xff]
        %v441 = vld [vmem:[#allocation2 + $0x40] sm:$0xf]
        %v442 = vld [vmem:[#allocation2 + $0x48] sm:$0xf]
        %v443 = vld [vmem:[%s2] sm:$0xff]
        %445 = vset.pattern.permute.xlu0 0
        %446 = vperm.xlu0 %445, %v443
        %v447 = vpop.permute.xlu0 %446
        %vm449 = vcmask 293888
        %v451 = vsel %vm449, %v432, 0
        %vm453 = vcmask 1043456
        %v455 = vsel %vm453, %v441, 0
        %v458 = vsel %vm453, %v442, 0
        %460 = vmatprep.subr.mxu0 %v434
        %461 = vmatpush1.msra.mxu0 %v433
        %462 = vmatprep.subr.mxu0 %v436
        %463 = vmatpush1.msra.mxu0 %v435
        %464 = vmatprep.subr.mxu0 %v438
        %465 = vmatpush1.msra.mxu0 %v437
        %466 = vmatprep.subr.mxu0 %v440
        %467 = vmatpush1.msra.mxu0 %v439
        %468 = vmatprep.subr.mxu0 %v458
        %469 = vmatpush1.msra.mxu0 %v455
        %470 = vmatprep.subr.mxu0 0.0
        %471 = vmatpush1.msra.mxu0 0.0
        %472 = vmatprep.subr.mxu0 0.0
        %473 = vmatpush1.msra.mxu0 0.0
        %474 = vmatprep.subr.mxu0 0.0
        %475 = vmatpush1.msra.mxu0 0.0
        %476 = vmatprep.subr.mxu0 0.0
        %477 = vmatpush1.msra.mxu0 0.0
        %478 = vmatprep.subr.mxu0 0.0
        %479 = vmatpush1.msra.mxu0 0.0
        %480 = vmatprep.subr.mxu0 0.0
        %481 = vmatpush1.msra.mxu0 0.0
        %482 = vmatprep.subr.mxu0 0.0
        %483 = vmatpush1.msra.mxu0 0.0
        %484 = vmatprep.subr.mxu0 0.0
        %485 = vmatpush1.msra.mxu0 0.0
        %486 = vmatprep.subr.mxu0 0.0
        %487 = vmatpush1.msra.mxu0 0.0
        %488 = vmatprep.subr.mxu0 0.0
        %489 = vmatpush1.msra.mxu0 0.0
        %490 = vmatprep.subr.mxu0 0.0
        %491 = vmatpush1.msra.mxu0 0.0
        %492 = vmatprep.subr.mxu0 0.0
        %493 = vmatpush1.msra.mxu0 0.0
        %494 = vmatprep.subr.mxu0 0.0
        %495 = vmatpush1.msra.mxu0 0.0
        %496 = vmatprep.subr.mxu0 0.0
        %497 = vmatpush1.msra.mxu0 0.0
        %498 = vmatprep.subr.mxu0 0.0
        %499 = vmatpush1.msra.mxu0 0.0
        %500 = vmatprep.subr.mxu0 0.0
        %501 = vmatpush1.msra.mxu0 0.0
        %502 = vmatprep.subr.mxu0 0.0
        %503 = vmatpush1.msra.mxu0 0.0
        %504 = vmatprep.subr.mxu0 0.0
        %505 = vmatpush1.msra.mxu0 0.0
        %506 = vmatprep.subr.mxu0 0.0
        %507 = vmatpush1.msra.mxu0 0.0
        %508 = vmatprep.subr.mxu0 0.0
        %509 = vmatpush1.msra.mxu0 0.0
        %510 = vmatprep.subr.mxu0 0.0
        %511 = vmatpush1.msra.mxu0 0.0
        %512 = vmatprep.subr.mxu0 0.0
        %513 = vmatpush1.msra.mxu0 0.0
        %514 = vmatprep.subr.mxu0 0.0
        %515 = vmatpush1.msra.mxu0 0.0
        %516 = vmatprep.subr.mxu0 0.0
        %517 = vmatpush1.msra.mxu0 0.0
        %518 = vmatprep.subr.mxu0 0.0
        %519 = vmatpush1.msra.mxu0 0.0
        %520 = vmatprep.subr.mxu0 0.0
        %521 = vmatpush1.msra.mxu0 0.0
        %522 = vmatprep.subr.mxu0 0.0
        %523 = vmatpush1.msra.mxu0 0.0
        %524 = vmatprep.mubr.f32.mxu0 0.0
        %525 = vmatmul.mubr.f32.gmra.mrb[0].mxu0 %v451
        %v526 = vpop.f32.mrb[0].mxu0
        %v527 = vadd.f32 %v447, %v526
        %v528 = vpop.f32.mrb[0].mxu0
        %v529 = vadd.f32 %v447, %v528
        %530 = vdwg.mxu0
        %v531 = vmax.f32 %v527, 0.0
        %v532 = vmax.f32 %v529, 0.0
        %533 = vst [vmem:[%s203] sm:$0xff] %v531
        %534 = vst [vmem:[%s203 + $0x8] sm:$0xff] %v532
        %s535 = sand.u32 %s116, 1
        %s536 = scalar_lea.sflag [#allocation5], %s535
        %s537 = sand.u32 %s116, 1
        %s538 = smul.addr %s537, 16
        %s539 = scalar_lea.vmem [#allocation6], %s538
        // Predicated region
        $region41: #{tpu_custom_call.1} parent=35 // pred_check
          %p540 = pneg %p126
        $region42: #{tpu_custom_call.1} parent=35 // pred_check_branch
          %542 = sbr.rel (%p540) target = $region44
        $region43: #{tpu_custom_call.1} parent=35 // pred_region
          %s544 = ssub.s32 256, 256
          %545 = vsyncadd %s536, %s544
          %s546 = smul.addr %s19, 2
          %s547 = smul.addr %s546, 128
          %s548 = scalar_lea.hbm %s4, %s547
          %s550 = sshll.u32 %s539, 4
          %s551 = int_to_ptr.vmem [resolvable:$true] %s550
          %553 = dma.vmem_to_hbm [thread:$0]  %s551, 256, %s548, %s536
        $region44: #{tpu_custom_call.1} parent=35 // pred_fallthru
          _
      $region36: #{tpu_custom_call.1} parent=5 // pred_fallthru
        _
      %p554 = scmp.le.s32.totalorder 2, %s14
      // Predicated region
      $region45: #{tpu_custom_call.1} parent=5 // pred_check
        %p555 = pneg %p554
      $region46: #{tpu_custom_call.1} parent=5 // pred_check_branch
        %557 = sbr.rel (%p555) target = $region48
      $region47: #{tpu_custom_call.1} parent=5 // pred_region
        %s558 = ssub.s32 %s14, 2
        // Predicated region
        $region49: #{tpu_custom_call.1} parent=47 // pred_check
          %p559 = pneg %p132
        $region50: #{tpu_custom_call.1} parent=47 // pred_check_branch
          %561 = sbr.rel (%p559) target = $region52
        $region51: #{tpu_custom_call.1} parent=47 // pred_region
          %s562 = sand.u32 %s117, 1
          %s563 = scalar_lea.sflag [#allocation5], %s562
          %s564 = sand.u32 %s117, 1
          %s565 = smul.addr %s564, 16
          %s566 = scalar_lea.vmem [#allocation6], %s565
          %567 = dma.done %s563, 256
        $region52: #{tpu_custom_call.1} parent=47 // pred_fallthru
          _
      $region48: #{tpu_custom_call.1} parent=5 // pred_fallthru
        _
    $region6: #{tpu_custom_call.1} parent=1 // loop_footer
      %s18 = sadd.s32 1, %s14
    $region7: #{tpu_custom_call.1} parent=1 // loop_footer_branch
      %13 = sbr.rel target = $region3
    $region8: #{tpu_custom_call.1} parent=1 // loop_exit
      _
    %568 = vsyncpa [#allocation4], 1
    %s569 = scalar_lea.sflag [#allocation4], 1
    %570 = vsyncpa %s569, 1
    %571 = vsyncpa [#allocation5], 1
    %s572 = scalar_lea.sflag [#allocation5], 1
    %573 = vsyncpa %s572, 1

</llo_original>
